<compile_context>
chip_gen: v7x
topology: tpu7x:2x2x1
jax: 0.10.0
libtpu: 0.0.40
codegen_flags: <defaults>
</compile_context>

<pallas_src>
import math

import jax
import jax.numpy as jnp
from jax.experimental import pallas as pl
from jax.experimental.pallas import tpu as pltpu


def _round_up(x, m):
    return ((x + m - 1) // m) * m


def mil_attention_kernel(bag_ref, packed_ref, cls_wt_ref,
                         logits_ref, weights_ref, acc_ref):
    B, tile_n, D = bag_ref.shape
    _, H, _ = weights_ref.shape
    HD, C = cls_wt_ref.shape
    n_idx = pl.program_id(0)

    @pl.when(n_idx == 0)
    def _init():
        acc_ref[...] = jnp.zeros_like(acc_ref)

    x = bag_ref[...]                                  # (B, tile_n, D), streamed dtype
    pk = packed_ref[...]                              # (H+3, P) f32
    att_w = pk[0:H, :D]                               # (H, D) f32

    # Layout-preserving merge (tile_n is a multiple of 128 >= 8/16 sublanes).
    x2 = x.reshape(B * tile_n, D)                     # (B*tile_n, D)

    # One fused all-head, all-bag score matmul (instance axis lane-dense).
    # The per-head Linear bias is uniform along the softmax (dim-0) axis and
    # cancels exactly, so it is never applied in-kernel.
    nd_score = (((1,), (1,)), ((), ()))               # contract D
    if x.dtype == jnp.float32:
        s_flat = jax.lax.dot_general(att_w, x2, nd_score,
                                     preferred_element_type=jnp.float32)
    else:
        # bf16 hi+lo split of att_w: f32-level score accuracy without ever
        # upcasting the streamed bag tile.
        w_hi = att_w.astype(x.dtype)
        w_lo = (att_w - w_hi.astype(jnp.float32)).astype(x.dtype)
        s_flat = (
            jax.lax.dot_general(w_hi, x2, nd_score,
                                preferred_element_type=jnp.float32)
            + jax.lax.dot_general(w_lo, x2, nd_score,
                                  preferred_element_type=jnp.float32))
    # (H, B*tile_n) -> stacked (B, H, tile_n); static lane-aligned slices.
    s = jnp.stack(
        [s_flat[:, b * tile_n:(b + 1) * tile_n] for b in range(B)], axis=0)

    # softmax over the bag axis (dim 0 of the PyTorch scores).
    m = jnp.max(s, axis=0, keepdims=True)
    e = jnp.exp(s - m)
    # exact divide; pl.reciprocal(approx=True) would cost ~1e-3 relative
    # accuracy on the returned weights.
    inv = 1.0 / jnp.sum(e, axis=0, keepdims=True)
    a = e * inv                                       # (B, H, tile_n) f32

    weights_ref[...] = a                              # single lane-dense store

    # Aggregation: acc[b, h, :] += sum_n a[b, h, n] * x[b, n, :]   (MXU, batched)
    nd_agg = (((2,), (1,)), ((0,), (0,)))             # contract tile_n, batch B
    if x.dtype == jnp.float32:
        acc_ref[...] += jax.lax.dot_general(a, x, nd_agg,
                                            preferred_element_type=jnp.float32)
    else:
        # bf16 hi+lo split of the weights keeps the aggregation at f32-level
        # accuracy; padded (zero) instances contribute exactly zero.
        a_hi = a.astype(x.dtype)
        a_lo = (a - a_hi.astype(jnp.float32)).astype(x.dtype)
        acc_ref[...] += (
            jax.lax.dot_general(a_hi, x, nd_agg,
                                preferred_element_type=jnp.float32)
            + jax.lax.dot_general(a_lo, x, nd_agg,
                                  preferred_element_type=jnp.float32))

    @pl.when(n_idx == pl.num_programs(0) - 1)
    def _finalize():
        # torch.cat(aggregated_features, dim=1) == head-major flatten.
        feat = acc_ref[...].reshape(B, HD)            # (B, H*D)
        scale = pk[H:H + 1, :HD]                      # folded BN scale
        shift = pk[H + 1:H + 2, :HD]                  # folded BN shift
        y = jnp.maximum(feat * scale + shift, 0.0)    # BN (eval) + ReLU
        logits_ref[...] = (
            jnp.dot(y, cls_wt_ref[...], preferred_element_type=jnp.float32)
            + pk[H + 2:H + 3, :C])


def mil_attention_forward(bag, params, tile_n=None, stream_dtype=jnp.bfloat16):
    """MILAttentionModel forward.

    Returns (logits (B, C), attention weights (B, N, H)).

    `stream_dtype` controls the dtype the bag is streamed in (bf16 halves HBM
    bytes; pass jnp.float32 for exact f32 streaming, or None to keep the
    caller's dtype).
    """
    B, N, D = bag.shape
    H = params["att_w"].shape[0]
    C = params["cls_w"].shape[0]
    HD = H * D

    if stream_dtype is not None:
        bag = bag.astype(stream_dtype)

    # Tile selection: largest 128-multiple tile (memory-bound kernel; big
    # tiles amortize the ~0.35 us per-grid-step overhead), capped at 8192 so a
    # double-buffered bf16 block stays ~1 MiB (safe even in v7x's 32 MiB
    # scoped VMEM).
    if tile_n is None:
        tile_n = min(8192, _round_up(N, 128))
    else:
        tile_n = _round_up(int(tile_n), 128)
    num_tiles = pl.cdiv(N, tile_n)
    n_pad = num_tiles * tile_n
    if n_pad != N:
        # One-time zero-pad of the ragged tail (replaces the per-tile in-kernel
        # mask; never reads OOB HBM, so no Inf/NaN can poison the accumulator).
        bag = jnp.pad(bag, ((0, 0), (0, n_pad - N), (0, 0)))

    # Fold eval-mode BatchNorm1d into a single scale/shift.
    scale = params["bn_gamma"] * jax.lax.rsqrt(params["bn_var"] + 1e-5)
    shift = params["bn_beta"] - params["bn_mean"] * scale

    # Pack the small parameters into one VMEM input:
    #   rows [0:H] = att_w, row H = BN scale, row H+1 = BN shift,
    #   row H+2 = classifier bias.
    P = max(D, HD, C)
    packed = jnp.zeros((H + 3, P), jnp.float32)
    packed = packed.at[0:H, :D].set(params["att_w"].astype(jnp.float32))
    packed = packed.at[H, :HD].set(scale.astype(jnp.float32))
    packed = packed.at[H + 1, :HD].set(shift.astype(jnp.float32))
    packed = packed.at[H + 2, :C].set(
        params["cls_b"].reshape(-1).astype(jnp.float32))

    cls_wt = params["cls_w"].astype(jnp.float32).T    # (H*D, C), pre-transposed

    logits, weights_bhn = pl.pallas_call(
        mil_attention_kernel,
        out_shape=(
            jax.ShapeDtypeStruct((B, C), jnp.float32),       # classifier logits
            jax.ShapeDtypeStruct((B, H, n_pad), jnp.float32),  # lane-dense weights
        ),
        grid=(num_tiles,),
        in_specs=[
            pl.BlockSpec((B, tile_n, D), lambda n: (0, n, 0)),   # bag tile
            pl.BlockSpec((H + 3, P), lambda n: (0, 0)),          # packed params
            pl.BlockSpec((HD, C), lambda n: (0, 0)),             # classifier weight
        ],
        out_specs=(
            pl.BlockSpec((B, C), lambda n: (0, 0)),              # resident, last write
            pl.BlockSpec((B, H, tile_n), lambda n: (0, 0, n)),   # per-tile weights
        ),
        scratch_shapes=[pltpu.VMEM((B, H, D), jnp.float32)],     # feature accumulator
        compiler_params=pltpu.CompilerParams(
            # N is a reduction axis (accumulator + resident logits) -> arbitrary.
            # A "parallel" bag axis is not applicable: the dim-0 softmax couples
            # all bags of the batch.
            dimension_semantics=("arbitrary",),
            vmem_limit_bytes=32 * 1024 * 1024,
        ),
    )(bag, packed, cls_wt)

    # Back to the PyTorch layout: per-head softmax weights as (B, N, H);
    # drop the zero-padded instance columns.
    weights = jnp.transpose(weights_bhn[:, :, :N], (0, 2, 1))
    return logits, weights


def mil_attention_reference(bag, params):
    """Pure-JAX reference with identical (eval-mode) semantics."""
    bag = bag.astype(jnp.float32)
    B, N, D = bag.shape
    H = params["att_w"].shape[0]
    scores = jnp.einsum("bnd,hd->bnh", bag, params["att_w"],
                        precision=jax.lax.Precision.HIGHEST) + params["att_b"]
    w = jax.nn.softmax(scores, axis=0)                # softmax over dim 0
    agg = jnp.einsum("bnh,bnd->bhd", w, bag,
                     precision=jax.lax.Precision.HIGHEST).reshape(B, H * D)
    y = (agg - params["bn_mean"]) / jnp.sqrt(params["bn_var"] + 1e-5)
    y = y * params["bn_gamma"] + params["bn_beta"]
    y = jnp.maximum(y, 0.0)
    logits = y @ params["cls_w"].T + params["cls_b"]
    return logits, w


if __name__ == "__main__":
    # Small shapes consistent with the module: B=2 bags, N=256 instances each,
    # input_dim=32, num_heads=2, num_classes=4.  tile_n=128 forces a 2-step
    # grid to exercise the accumulator / resident-output path.
    B, N, D, H, C = 2, 256, 32, 2, 4

    key = jax.random.PRNGKey(0)
    keys = jax.random.split(key, 9)
    bag = jax.random.normal(keys[0], (B, N, D), jnp.float32).astype(jnp.bfloat16)

    lim_att = 1.0 / math.sqrt(D)
    lim_cls = 1.0 / math.sqrt(H * D)
    params = dict(
        att_w=jax.random.uniform(keys[1], (H, D), jnp.float32, -lim_att, lim_att),
        att_b=jax.random.uniform(keys[2], (H,), jnp.float32, -lim_att, lim_att),
        bn_gamma=jax.random.uniform(keys[3], (H * D,), jnp.float32, 0.5, 1.5),
        bn_beta=0.1 * jax.random.normal(keys[4], (H * D,), jnp.float32),
        bn_mean=0.1 * jax.random.normal(keys[5], (H * D,), jnp.float32),
        bn_var=jax.random.uniform(keys[6], (H * D,), jnp.float32, 0.5, 1.5),
        cls_w=jax.random.uniform(keys[7], (C, H * D), jnp.float32, -lim_cls, lim_cls),
        cls_b=jax.random.uniform(keys[8], (C,), jnp.float32, -lim_cls, lim_cls),
    )

    fwd = jax.jit(mil_attention_forward, static_argnames=("tile_n", "stream_dtype"))
    logits, weights = fwd(bag, params, tile_n=128)
    jax.block_until_ready((logits, weights))

    ref_logits, ref_weights = mil_attention_reference(bag, params)
    assert logits.shape == (B, C) and weights.shape == (B, N, H)
    # hi/lo bf16 operand splits keep kernel matmul accuracy at f32 level, so
    # the original tight tolerances still hold.
    assert jnp.allclose(logits, ref_logits, atol=2e-3, rtol=2e-3), "logits mismatch"
    assert jnp.allclose(weights, ref_weights, atol=1e-3, rtol=1e-3), "weights mismatch"

    print("KERNEL_OK")
</pallas_src>

<mosaic_0001>
module attributes {stable_mosaic.version = 11 : i64} {
  func.func @mil_attention_kernel(%arg0: i32, %arg1: memref<2x128x32xbf16, #tpu.memory_space<vmem>>, %arg2: memref<5x64xf32, #tpu.memory_space<vmem>>, %arg3: memref<64x4xf32, #tpu.memory_space<vmem>>, %arg4: memref<2x4xf32, #tpu.memory_space<vmem>>, %arg5: memref<2x2x128xf32, #tpu.memory_space<vmem>>, %arg6: memref<2x2x32xf32, #tpu.memory_space<vmem>>) attributes {dimension_semantics = [#tpu.dimension_semantics<arbitrary>], iteration_bounds = array<i64: 2>, scalar_prefetch = 0 : i64, scratch_operands = 1 : i64, tpu.core_type = #tpu.core_type<tc>, window_params = [{transform_indices = @transform_0, window_bounds = array<i64: 2, 128, 32>}, {pipeline_mode = #tpu.pipeline_mode<synchronous>, transform_indices = @transform_1, window_bounds = array<i64: 5, 64>}, {pipeline_mode = #tpu.pipeline_mode<synchronous>, transform_indices = @transform_2, window_bounds = array<i64: 64, 4>}, {pipeline_mode = #tpu.pipeline_mode<synchronous>, transform_indices = @transform_3, window_bounds = array<i64: 2, 4>}, {transform_indices = @transform_4, window_bounds = array<i64: 2, 2, 128>}]} {
    %c0_i32 = arith.constant 0 : i32
    %0 = arith.cmpi eq, %arg0, %c0_i32 : i32
    %1 = arith.extui %0 : i1 to i32
    %c0_i32_0 = arith.constant 0 : i32
    %2 = arith.cmpi ne, %1, %c0_i32_0 : i32
    scf.if %2 {
      %cst_21 = arith.constant 0.000000e+00 : f32
      %44 = vector.broadcast %cst_21 : f32 to vector<2x2x32xf32>
      %c0_22 = arith.constant 0 : index
      %c0_23 = arith.constant 0 : index
      %c0_24 = arith.constant 0 : index
      %45 = vector.load %arg6[%c0_22, %c0_23, %c0_24] : memref<2x2x32xf32, #tpu.memory_space<vmem>>, vector<2x2x32xf32>
      tpu.vector_store %arg6[%c0_22, %c0_23, %c0_24], %44 {strides = array<i32>} : memref<2x2x32xf32, #tpu.memory_space<vmem>>, vector<2x2x32xf32>,
    } else {
    }
    %c0 = arith.constant 0 : index
    %c0_1 = arith.constant 0 : index
    %c0_2 = arith.constant 0 : index
    %3 = vector.load %arg1[%c0, %c0_1, %c0_2] : memref<2x128x32xbf16, #tpu.memory_space<vmem>>, vector<2x128x32xbf16>
    %c0_3 = arith.constant 0 : index
    %c0_4 = arith.constant 0 : index
    %4 = vector.load %arg2[%c0_3, %c0_4] : memref<5x64xf32, #tpu.memory_space<vmem>>, vector<5x64xf32>
    %5 = vector.extract_strided_slice %4 {offsets = [0, 0], sizes = [2, 32], strides = [1, 1]} : vector<5x64xf32> to vector<2x32xf32>
    %6 = vector.shape_cast %3 : vector<2x128x32xbf16> to vector<256x32xbf16>
    %7 = arith.truncf %5 : vector<2x32xf32> to vector<2x32xbf16>
    %8 = arith.extf %7 : vector<2x32xbf16> to vector<2x32xf32>
    %9 = arith.subf %5, %8 : vector<2x32xf32>
    %10 = arith.truncf %9 : vector<2x32xf32> to vector<2x32xbf16>
    %cst = arith.constant dense<0.000000e+00> : vector<2x256xf32>
    %11 = tpu.matmul %7, %6, %cst {dimension_numbers = #tpu.dot_dimension_numbers<[1], [1], [0], [0], [0, 0, 1, 0], [], []>} : vector<2x32xbf16>, vector<256x32xbf16>, vector<2x256xf32> -> vector<2x256xf32>
    %cst_5 = arith.constant dense<0.000000e+00> : vector<2x256xf32>
    %12 = tpu.matmul %10, %6, %cst_5 {dimension_numbers = #tpu.dot_dimension_numbers<[1], [1], [0], [0], [0, 0, 1, 0], [], []>} : vector<2x32xbf16>, vector<256x32xbf16>, vector<2x256xf32> -> vector<2x256xf32>
    %13 = arith.addf %11, %12 : vector<2x256xf32>
    %14 = vector.extract_strided_slice %13 {offsets = [0, 0], sizes = [2, 128], strides = [1, 1]} : vector<2x256xf32> to vector<2x128xf32>
    %15 = vector.extract_strided_slice %13 {offsets = [0, 128], sizes = [2, 128], strides = [1, 1]} : vector<2x256xf32> to vector<2x128xf32>
    %16 = vector.shape_cast %14 : vector<2x128xf32> to vector<1x2x128xf32>
    %17 = vector.shape_cast %15 : vector<2x128xf32> to vector<1x2x128xf32>
    %18 = tpu.concatenate %16, %17 in 0 : vector<1x2x128xf32>, vector<1x2x128xf32> -> vector<2x2x128xf32>
    %cst_6 = arith.constant dense<0xFF800000> : vector<2x128xf32>
    %19 = vector.multi_reduction <maximumf>, %18, %cst_6 [0] : vector<2x2x128xf32> to vector<2x128xf32>
    %20 = vector.shape_cast %19 : vector<2x128xf32> to vector<1x2x128xf32>
    %21 = vector.broadcast %20 : vector<1x2x128xf32> to vector<2x2x128xf32>
    %22 = arith.subf %18, %21 : vector<2x2x128xf32>
    %23 = math.exp %22 : vector<2x2x128xf32>
    %cst_7 = arith.constant dense<0.000000e+00> : vector<2x128xf32>
    %24 = vector.multi_reduction <add>, %23, %cst_7 [0] : vector<2x2x128xf32> to vector<2x128xf32>
    %25 = vector.shape_cast %24 : vector<2x128xf32> to vector<1x2x128xf32>
    %cst_8 = arith.constant 1.000000e+00 : f32
    %26 = vector.broadcast %cst_8 : f32 to vector<1x2x128xf32>
    %27 = arith.divf %26, %25 : vector<1x2x128xf32>
    %28 = vector.broadcast %27 : vector<1x2x128xf32> to vector<2x2x128xf32>
    %29 = arith.mulf %23, %28 : vector<2x2x128xf32>
    %c0_9 = arith.constant 0 : index
    %c0_10 = arith.constant 0 : index
    %c0_11 = arith.constant 0 : index
    %30 = vector.load %arg5[%c0_9, %c0_10, %c0_11] : memref<2x2x128xf32, #tpu.memory_space<vmem>>, vector<2x2x128xf32>
    tpu.vector_store %arg5[%c0_9, %c0_10, %c0_11], %29 {strides = array<i32>} : memref<2x2x128xf32, #tpu.memory_space<vmem>>, vector<2x2x128xf32>,
    %31 = arith.truncf %29 : vector<2x2x128xf32> to vector<2x2x128xbf16>
    %32 = arith.extf %31 : vector<2x2x128xbf16> to vector<2x2x128xf32>
    %33 = arith.subf %29, %32 : vector<2x2x128xf32>
    %34 = arith.truncf %33 : vector<2x2x128xf32> to vector<2x2x128xbf16>
    %c0_12 = arith.constant 0 : index
    %c0_13 = arith.constant 0 : index
    %c0_14 = arith.constant 0 : index
    %35 = vector.load %arg6[%c0_12, %c0_13, %c0_14] : memref<2x2x32xf32, #tpu.memory_space<vmem>>, vector<2x2x32xf32>
    %cst_15 = arith.constant dense<0.000000e+00> : vector<2x2x32xf32>
    %36 = tpu.matmul %31, %3, %cst_15 {dimension_numbers = #tpu.dot_dimension_numbers<[2], [1], [1], [2], [0, 0, 0, 1, 1, 2], [0], [0]>} : vector<2x2x128xbf16>, vector<2x128x32xbf16>, vector<2x2x32xf32> -> vector<2x2x32xf32>
    %cst_16 = arith.constant dense<0.000000e+00> : vector<2x2x32xf32>
    %37 = tpu.matmul %34, %3, %cst_16 {dimension_numbers = #tpu.dot_dimension_numbers<[2], [1], [1], [2], [0, 0, 0, 1, 1, 2], [0], [0]>} : vector<2x2x128xbf16>, vector<2x128x32xbf16>, vector<2x2x32xf32> -> vector<2x2x32xf32>
    %38 = arith.addf %36, %37 : vector<2x2x32xf32>
    %39 = arith.addf %35, %38 : vector<2x2x32xf32>
    %c0_17 = arith.constant 0 : index
    %c0_18 = arith.constant 0 : index
    %c0_19 = arith.constant 0 : index
    %40 = vector.load %arg6[%c0_17, %c0_18, %c0_19] : memref<2x2x32xf32, #tpu.memory_space<vmem>>, vector<2x2x32xf32>
    tpu.vector_store %arg6[%c0_17, %c0_18, %c0_19], %39 {strides = array<i32>} : memref<2x2x32xf32, #tpu.memory_space<vmem>>, vector<2x2x32xf32>,
    %c1_i32 = arith.constant 1 : i32
    %41 = arith.cmpi eq, %arg0, %c1_i32 : i32
    %42 = arith.extui %41 : i1 to i32
    %c0_i32_20 = arith.constant 0 : i32
    %43 = arith.cmpi ne, %42, %c0_i32_20 : i32
    scf.if %43 {
      %c0_21 = arith.constant 0 : index
      %c0_22 = arith.constant 0 : index
      %c0_23 = arith.constant 0 : index
      %44 = vector.load %arg6[%c0_21, %c0_22, %c0_23] : memref<2x2x32xf32, #tpu.memory_space<vmem>>, vector<2x2x32xf32>
      %45 = vector.shape_cast %44 : vector<2x2x32xf32> to vector<2x64xf32>
      %46 = vector.extract_strided_slice %4 {offsets = [2, 0], sizes = [1, 64], strides = [1, 1]} : vector<5x64xf32> to vector<1x64xf32>
      %47 = vector.extract_strided_slice %4 {offsets = [3, 0], sizes = [1, 64], strides = [1, 1]} : vector<5x64xf32> to vector<1x64xf32>
      %48 = vector.broadcast %46 : vector<1x64xf32> to vector<2x64xf32>
      %49 = arith.mulf %45, %48 : vector<2x64xf32>
      %50 = vector.broadcast %47 : vector<1x64xf32> to vector<2x64xf32>
      %51 = arith.addf %49, %50 : vector<2x64xf32>
      %cst_24 = arith.constant 0.000000e+00 : f32
      %52 = vector.broadcast %cst_24 : f32 to vector<2x64xf32>
      %53 = arith.maximumf %51, %52 : vector<2x64xf32>
      %c0_25 = arith.constant 0 : index
      %c0_26 = arith.constant 0 : index
      %54 = vector.load %arg3[%c0_25, %c0_26] : memref<64x4xf32, #tpu.memory_space<vmem>>, vector<64x4xf32>
      %cst_27 = arith.constant dense<0.000000e+00> : vector<2x4xf32>
      %55 = tpu.matmul %53, %54, %cst_27 {dimension_numbers = #tpu.dot_dimension_numbers<[1], [0], [0], [1], [0, 0, 1, 1], [], []>} : vector<2x64xf32>, vector<64x4xf32>, vector<2x4xf32> -> vector<2x4xf32>
      %56 = vector.extract_strided_slice %4 {offsets = [4, 0], sizes = [1, 4], strides = [1, 1]} : vector<5x64xf32> to vector<1x4xf32>
      %57 = vector.broadcast %56 : vector<1x4xf32> to vector<2x4xf32>
      %58 = arith.addf %55, %57 : vector<2x4xf32>
      %c0_28 = arith.constant 0 : index
      %c0_29 = arith.constant 0 : index
      %59 = vector.load %arg4[%c0_28, %c0_29] : memref<2x4xf32, #tpu.memory_space<vmem>>, vector<2x4xf32>
      tpu.vector_store %arg4[%c0_28, %c0_29], %58 {strides = array<i32>} : memref<2x4xf32, #tpu.memory_space<vmem>>, vector<2x4xf32>,
    } else {
    }
    return
  }
  func.func @transform_0(%arg0: i32) -> (i32, i32, i32) {
    %c0_i32 = arith.constant 0 : i32
    %c0_i32_0 = arith.constant 0 : i32
    %c0_i32_1 = arith.constant 0 : i32
    return %c0_i32, %arg0, %c0_i32_0 : i32, i32, i32
  }
  func.func @transform_1(%arg0: i32) -> (i32, i32) {
    %c0_i32 = arith.constant 0 : i32
    %c0_i32_0 = arith.constant 0 : i32
    %c0_i32_1 = arith.constant 0 : i32
    return %c0_i32, %c0_i32_0 : i32, i32
  }
  func.func @transform_2(%arg0: i32) -> (i32, i32) {
    %c0_i32 = arith.constant 0 : i32
    %c0_i32_0 = arith.constant 0 : i32
    %c0_i32_1 = arith.constant 0 : i32
    return %c0_i32, %c0_i32_0 : i32, i32
  }
  func.func @transform_3(%arg0: i32) -> (i32, i32) {
    %c0_i32 = arith.constant 0 : i32
    %c0_i32_0 = arith.constant 0 : i32
    %c0_i32_1 = arith.constant 0 : i32
    return %c0_i32, %c0_i32_0 : i32, i32
  }
  func.func @transform_4(%arg0: i32) -> (i32, i32, i32) {
    %c0_i32 = arith.constant 0 : i32
    %c0_i32_0 = arith.constant 0 : i32
    %c0_i32_1 = arith.constant 0 : i32
    return %c0_i32, %c0_i32_0, %arg0 : i32, i32, i32
  }
}

</mosaic_0001>

<llo_original>
// kernel: mil_attention_forward.1
$region0: #{mil_attention_forward.1}
  #allocation0 [shape = 'u32[]', space=smem, size = 0x4, offset = 0x4, fixed_abs, tag = 'smem constant byte address 0x4 - core index']
  #allocation1 [shape = 'u32[144,128]{1,0:T(1,128)}', space=vmem, size = 0x12000, scoped, tag = 'internal scratch']
  #allocation2 [shape = 'f32[2,2,32]{2,1,0:T(2,128)}', space=vmem, size = 0x800, scoped, tag = 'scratch operand']
  %s0 = inlined_call_operand.vmem [shape: bf16[2,256,32], index: 0, kind: input, shape index: {}]
  %s1 = inlined_call_operand.vmem [shape: f32[5,64], index: 1, kind: input, shape index: {}]
  %s2 = inlined_call_operand.vmem [shape: f32[64,4], index: 2, kind: input, shape index: {}]
  %s3 = inlined_call_operand.hbm [shape: f32[2,4], index: 3, kind: output, shape index: {0}]
  %s4 = inlined_call_operand.hbm [shape: f32[2,2,256], index: 4, kind: output, shape index: {1}]
  %5 = xla_tuple %s3, %s4
  %s6 = sld [smem:[#allocation0]]
  $region102: #{mil_attention_forward.1} parent=0
    _
  %s8 = ssub.s32 1, %s6
  %s9 = scalar_select 0, %s8, %s6
  $region1: #{mil_attention_forward.1} parent=0
    #allocation3 [shape = 'u8[131072]{0}', space=vmem, size = 0x20000, scoped, tag = 'input window, operand 0']
    #allocation4 [shape = 'u8[1024]{0}', space=vmem, size = 0x400, scoped, tag = 'output window, operand 0, single buffered']
    #allocation5 [shape = 's32[2]{0}', space=sflag, size = 0x8, scoped, tag = 'scoped memory for mil_attention_forward.1']
    #allocation6 [shape = 'u8[4096]{0}', space=vmem, size = 0x1000, scoped, tag = 'output window, operand 1']
    #allocation7 [shape = 's32[2]{0}', space=sflag, size = 0x8, scoped, tag = 'scoped memory for mil_attention_forward.1']
    %10 = vsyncpa [#allocation5], 0
    %11 = vsyncpa [#allocation7], 0
    %s12 = scalar_lea.sflag [#allocation7], 1
    %13 = vsyncpa %s12, 0
    loop: start=0, step=1, limit=4
    $region2: #{mil_attention_forward.1} parent=1 // loop_pre_header
      _
    $region3: #{mil_attention_forward.1} parent=1 // loop_header
      %s15 = sphi 0, %s19
      %p16 = scmp.ge.s32.totalorder %s15, 4
      %s25 = sphi 0, %s27
      %s28 = sphi 0, %s25
      %s29 = sphi 0, %s28
      %s45 = sphi 0, %s29
      %s49 = sphi 0, %s49
      %s51 = sphi 0, %s49
      %s52 = sphi 0, %s51
      %s66 = sphi 0, %s52
      %s70 = sphi 0, %s70
      %s72 = sphi 0, %s70
      %s73 = sphi 0, %s72
      %s87 = sphi 0, %s73
      %s91 = sphi 0, %s91
      %s93 = sphi 0, %s91
      %s94 = sphi 0, %s93
      %s108 = sphi 0, %s94
      %s114 = sphi 0, %s116
      %s117 = sphi 0, %s114
      %s118 = sphi 0, %s117
      %s134 = sphi 0, %s118
    $region4: #{mil_attention_forward.1} parent=1 // loop_header_branch
      %18 = sbr.rel (%p16) target = $region8
    $region5: #{mil_attention_forward.1} parent=1 // loop_body
      %s20 = ssub.s32 %s15, 1
      %s21 = ssub.s32 %s15, 2
      %s22 = sadd.s32 %s15, 1
      %s23 = ssub.s32 %s15, %s22
      %p24 = scmp.eq.s32.totalorder %s23, 0
      %s26 = sadd.s32 %s25, 1
      %s27 = scalar_select %p24, %s25, %s26
      %p30 = pneg %p24
      %p31 = scmp.eq.s32.totalorder %s15, 1
      %p32 = por %p30, %p31
      %p33 = scmp.ne.s32.totalorder %s25, %s28
      %p34 = scmp.eq.s32.totalorder %s15, 0
      %p35 = por %p33, %p34
      %p36 = scmp.ne.s32.totalorder %s25, %s28
      %p37 = scmp.eq.s32.totalorder %s20, 1
      %p38 = por %p36, %p37
      %p39 = scmp.ne.s32.totalorder %s28, %s29
      %p40 = scmp.eq.s32.totalorder %s20, 0
      %p41 = por %p39, %p40
      %p42 = scmp.ne.s32.totalorder %s28, %s29
      %p43 = scmp.eq.s32.totalorder %s21, 1
      %p44 = por %p42, %p43
      %p46 = scmp.ne.s32.totalorder %s29, %s45
      %p47 = scmp.eq.s32.totalorder %s21, 0
      %p48 = por %p46, %p47
      %s50 = sadd.s32 %s49, 1
      %p53 = scmp.eq.s32.totalorder %s15, 1
      %p54 = scmp.ne.s32.totalorder %s49, %s51
      %p55 = scmp.eq.s32.totalorder %s15, 0
      %p56 = por %p54, %p55
      %p57 = scmp.ne.s32.totalorder %s49, %s51
      %p58 = scmp.eq.s32.totalorder %s20, 1
      %p59 = por %p57, %p58
      %p60 = scmp.ne.s32.totalorder %s51, %s52
      %p61 = scmp.eq.s32.totalorder %s20, 0
      %p62 = por %p60, %p61
      %p63 = scmp.ne.s32.totalorder %s51, %s52
      %p64 = scmp.eq.s32.totalorder %s21, 1
      %p65 = por %p63, %p64
      %p67 = scmp.ne.s32.totalorder %s52, %s66
      %p68 = scmp.eq.s32.totalorder %s21, 0
      %p69 = por %p67, %p68
      %s71 = sadd.s32 %s70, 1
      %p74 = scmp.eq.s32.totalorder %s15, 1
      %p75 = scmp.ne.s32.totalorder %s70, %s72
      %p76 = scmp.eq.s32.totalorder %s15, 0
      %p77 = por %p75, %p76
      %p78 = scmp.ne.s32.totalorder %s70, %s72
      %p79 = scmp.eq.s32.totalorder %s20, 1
      %p80 = por %p78, %p79
      %p81 = scmp.ne.s32.totalorder %s72, %s73
      %p82 = scmp.eq.s32.totalorder %s20, 0
      %p83 = por %p81, %p82
      %p84 = scmp.ne.s32.totalorder %s72, %s73
      %p85 = scmp.eq.s32.totalorder %s21, 1
      %p86 = por %p84, %p85
      %p88 = scmp.ne.s32.totalorder %s73, %s87
      %p89 = scmp.eq.s32.totalorder %s21, 0
      %p90 = por %p88, %p89
      %s92 = sadd.s32 %s91, 1
      %p95 = scmp.eq.s32.totalorder %s15, 1
      %p96 = scmp.ne.s32.totalorder %s91, %s93
      %p97 = scmp.eq.s32.totalorder %s15, 0
      %p98 = por %p96, %p97
      %p99 = scmp.ne.s32.totalorder %s91, %s93
      %p100 = scmp.eq.s32.totalorder %s20, 1
      %p101 = por %p99, %p100
      %p102 = scmp.ne.s32.totalorder %s93, %s94
      %p103 = scmp.eq.s32.totalorder %s20, 0
      %p104 = por %p102, %p103
      %p105 = scmp.ne.s32.totalorder %s93, %s94
      %p106 = scmp.eq.s32.totalorder %s21, 1
      %p107 = por %p105, %p106
      %p109 = scmp.ne.s32.totalorder %s94, %s108
      %p110 = scmp.eq.s32.totalorder %s21, 0
      %p111 = por %p109, %p110
      %s112 = ssub.s32 %s15, %s22
      %p113 = scmp.eq.s32.totalorder %s112, 0
      %s115 = sadd.s32 %s114, 1
      %s116 = scalar_select %p113, %s114, %s115
      %p119 = pneg %p113
      %p120 = scmp.eq.s32.totalorder %s15, 1
      %p121 = por %p119, %p120
      %p122 = scmp.ne.s32.totalorder %s114, %s117
      %p123 = scmp.eq.s32.totalorder %s15, 0
      %p124 = por %p122, %p123
      %p125 = scmp.ne.s32.totalorder %s114, %s117
      %p126 = scmp.eq.s32.totalorder %s20, 1
      %p127 = por %p125, %p126
      %p128 = scmp.ne.s32.totalorder %s117, %s118
      %p129 = scmp.eq.s32.totalorder %s20, 0
      %p130 = por %p128, %p129
      %p131 = scmp.ne.s32.totalorder %s117, %s118
      %p132 = scmp.eq.s32.totalorder %s21, 1
      %p133 = por %p131, %p132
      %p135 = scmp.ne.s32.totalorder %s118, %s134
      %p136 = scmp.eq.s32.totalorder %s21, 0
      %p137 = por %p135, %p136
      %p138 = scmp.le.s32.totalorder 1, %s15
      %p139 = scmp.lt.s32.totalorder %s15, 3
      %p140 = pnand %p138, %p139
      %p141 = pneg %p140
      // Predicated region
      $region9: #{mil_attention_forward.1} parent=5 // pred_check
        _
      $region10: #{mil_attention_forward.1} parent=5 // pred_check_branch
        %143 = sbr.rel (%p140) target = $region12
      $region11: #{mil_attention_forward.1} parent=5 // pred_region
        %s144 = ssub.s32 %s15, 1
        // Predicated region
        $region13: #{mil_attention_forward.1} parent=11 // pred_check
          %p145 = pneg %p62
        $region14: #{mil_attention_forward.1} parent=11 // pred_check_branch
          %147 = sbr.rel (%p145) target = $region16
        $region15: #{mil_attention_forward.1} parent=11 // pred_region
          _
        $region16: #{mil_attention_forward.1} parent=11 // pred_fallthru
          _
        // Predicated region
        $region17: #{mil_attention_forward.1} parent=11 // pred_check
          %p148 = pneg %p83
        $region18: #{mil_attention_forward.1} parent=11 // pred_check_branch
          %150 = sbr.rel (%p148) target = $region20
        $region19: #{mil_attention_forward.1} parent=11 // pred_region
          _
        $region20: #{mil_attention_forward.1} parent=11 // pred_fallthru
          _
      $region12: #{mil_attention_forward.1} parent=5 // pred_fallthru
        _
      %p151 = scmp.lt.s32.totalorder %s15, 2
      // Predicated region
      $region21: #{mil_attention_forward.1} parent=5 // pred_check
        %p152 = pneg %p151
      $region22: #{mil_attention_forward.1} parent=5 // pred_check_branch
        %154 = sbr.rel (%p152) target = $region24
      $region23: #{mil_attention_forward.1} parent=5 // pred_region
        // Predicated region
        $region25: #{mil_attention_forward.1} parent=23 // pred_check
          %p155 = pneg %p35
        $region26: #{mil_attention_forward.1} parent=23 // pred_check_branch
          %157 = sbr.rel (%p155) target = $region28
        $region27: #{mil_attention_forward.1} parent=23 // pred_region
          %s158 = sand.u32 %s25, 1
          %s159 = sand.u32 %s25, 1
          %s160 = smul.addr %s159, 128
          %s161 = scalar_lea.vmem [#allocation3], %s160
          %s162 = smul.u32 16, %s15
          %s163 = smul.addr %s162, 4
          %s164 = scalar_lea.vmem %s0, %s163
          // Predicated region
          $region29: #{mil_attention_forward.1} parent=27 // pred_check
            _
          $region30: #{mil_attention_forward.1} parent=27 // pred_check_branch
            %166 = sbr.rel (0) target = $region32
          $region31: #{mil_attention_forward.1} parent=27 // pred_region
            // Predicated region
            $region33: #{mil_attention_forward.1} parent=31 // pred_check
              _
            $region34: #{mil_attention_forward.1} parent=31 // pred_check_branch
              %168 = sbr.rel target = $region36
            $region35: #{mil_attention_forward.1} parent=31 // pred_region
              // Predicated region
              $region48: #{mil_attention_forward.1} parent=35 // pred_check
                _
              $region49: #{mil_attention_forward.1} parent=35 // pred_check_branch
                %245 = sbr.rel (0) target = $region51
              $region50: #{mil_attention_forward.1} parent=35 // pred_region
                loop: start=0, step=1, limit=1
                $region52: #{mil_attention_forward.1} parent=50 // loop_pre_header
                  _
                $region53: #{mil_attention_forward.1} parent=50 // loop_header
                  %s247 = sphi 0, %s251
                  %p248 = scmp.ge.s32.totalorder %s247, 1
                  %s252 = sphi %s164, %s164
                  %s253 = sphi %s161, %s161
                $region54: #{mil_attention_forward.1} parent=50 // loop_header_branch
                  %250 = sbr.rel (%p248) target = $region58
                $region55: #{mil_attention_forward.1} parent=50 // loop_body
                  _
                $region56: #{mil_attention_forward.1} parent=50 // loop_footer
                  %s251 = sadd.s32 1, %s247
                $region57: #{mil_attention_forward.1} parent=50 // loop_footer_branch
                  %246 = sbr.rel target = $region53
                $region58: #{mil_attention_forward.1} parent=50 // loop_exit
                  _
                loop: start=0, step=1, limit=1
                $region59: #{mil_attention_forward.1} parent=50 // loop_pre_header
                  _
                $region60: #{mil_attention_forward.1} parent=50 // loop_header
                  %s256 = sphi 0, %s260
                  %p257 = scmp.ge.s32.totalorder %s256, 1
                  %s261 = sphi %s164, %s164
                  %s262 = sphi %s161, %s161
                $region61: #{mil_attention_forward.1} parent=50 // loop_header_branch
                  %259 = sbr.rel (%p257) target = $region65
                $region62: #{mil_attention_forward.1} parent=50 // loop_body
                  %v263 = vld [vmem:[%s261] sm:$0xf]
                  %264 = vst [vmem:[%s262] sm:$0xf] %v263
                  %v265 = vld [vmem:[%s261 + $0x4] sm:$0xf]
                  %266 = vst [vmem:[%s262 + $0x4] sm:$0xf] %v265
                  %v267 = vld [vmem:[%s261 + $0x8] sm:$0xf]
                  %268 = vst [vmem:[%s262 + $0x8] sm:$0xf] %v267
                  %v269 = vld [vmem:[%s261 + $0xc] sm:$0xf]
                  %270 = vst [vmem:[%s262 + $0xc] sm:$0xf] %v269
                  %v271 = vld [vmem:[%s261 + $0x10] sm:$0xf]
                  %272 = vst [vmem:[%s262 + $0x10] sm:$0xf] %v271
                  %v273 = vld [vmem:[%s261 + $0x14] sm:$0xf]
                  %274 = vst [vmem:[%s262 + $0x14] sm:$0xf] %v273
                  %v275 = vld [vmem:[%s261 + $0x18] sm:$0xf]
                  %276 = vst [vmem:[%s262 + $0x18] sm:$0xf] %v275
                  %v277 = vld [vmem:[%s261 + $0x1c] sm:$0xf]
                  %278 = vst [vmem:[%s262 + $0x1c] sm:$0xf] %v277
                  %v279 = vld [vmem:[%s261 + $0x20] sm:$0xf]
                  %280 = vst [vmem:[%s262 + $0x20] sm:$0xf] %v279
                  %v281 = vld [vmem:[%s261 + $0x24] sm:$0xf]
                  %282 = vst [vmem:[%s262 + $0x24] sm:$0xf] %v281
                  %v283 = vld [vmem:[%s261 + $0x28] sm:$0xf]
                  %284 = vst [vmem:[%s262 + $0x28] sm:$0xf] %v283
                  %v285 = vld [vmem:[%s261 + $0x2c] sm:$0xf]
                  %286 = vst [vmem:[%s262 + $0x2c] sm:$0xf] %v285
                  %v287 = vld [vmem:[%s261 + $0x30] sm:$0xf]
                  %288 = vst [vmem:[%s262 + $0x30] sm:$0xf] %v287
                  %v289 = vld [vmem:[%s261 + $0x34] sm:$0xf]
                  %290 = vst [vmem:[%s262 + $0x34] sm:$0xf] %v289
                  %v291 = vld [vmem:[%s261 + $0x38] sm:$0xf]
                  %292 = vst [vmem:[%s262 + $0x38] sm:$0xf] %v291
                  %v293 = vld [vmem:[%s261 + $0x3c] sm:$0xf]
                  %294 = vst [vmem:[%s262 + $0x3c] sm:$0xf] %v293
                  %v295 = vld [vmem:[%s261 + $0x80] sm:$0xf]
                  %296 = vst [vmem:[%s262 + $0x40] sm:$0xf] %v295
                  %v297 = vld [vmem:[%s261 + $0x84] sm:$0xf]
                  %298 = vst [vmem:[%s262 + $0x44] sm:$0xf] %v297
                  %v299 = vld [vmem:[%s261 + $0x88] sm:$0xf]
                  %300 = vst [vmem:[%s262 + $0x48] sm:$0xf] %v299
                  %v301 = vld [vmem:[%s261 + $0x8c] sm:$0xf]
                  %302 = vst [vmem:[%s262 + $0x4c] sm:$0xf] %v301
                  %v303 = vld [vmem:[%s261 + $0x90] sm:$0xf]
                  %304 = vst [vmem:[%s262 + $0x50] sm:$0xf] %v303
                  %v305 = vld [vmem:[%s261 + $0x94] sm:$0xf]
                  %306 = vst [vmem:[%s262 + $0x54] sm:$0xf] %v305
                  %v307 = vld [vmem:[%s261 + $0x98] sm:$0xf]
                  %308 = vst [vmem:[%s262 + $0x58] sm:$0xf] %v307
                  %v309 = vld [vmem:[%s261 + $0x9c] sm:$0xf]
                  %310 = vst [vmem:[%s262 + $0x5c] sm:$0xf] %v309
                  %v311 = vld [vmem:[%s261 + $0xa0] sm:$0xf]
                  %312 = vst [vmem:[%s262 + $0x60] sm:$0xf] %v311
                  %v313 = vld [vmem:[%s261 + $0xa4] sm:$0xf]
                  %314 = vst [vmem:[%s262 + $0x64] sm:$0xf] %v313
                  %v315 = vld [vmem:[%s261 + $0xa8] sm:$0xf]
                  %316 = vst [vmem:[%s262 + $0x68] sm:$0xf] %v315
                  %v317 = vld [vmem:[%s261 + $0xac] sm:$0xf]
                  %318 = vst [vmem:[%s262 + $0x6c] sm:$0xf] %v317
                  %v319 = vld [vmem:[%s261 + $0xb0] sm:$0xf]
                  %320 = vst [vmem:[%s262 + $0x70] sm:$0xf] %v319
                  %v321 = vld [vmem:[%s261 + $0xb4] sm:$0xf]
                  %322 = vst [vmem:[%s262 + $0x74] sm:$0xf] %v321
                  %v323 = vld [vmem:[%s261 + $0xb8] sm:$0xf]
                  %324 = vst [vmem:[%s262 + $0x78] sm:$0xf] %v323
                  %v325 = vld [vmem:[%s261 + $0xbc] sm:$0xf]
                  %326 = vst [vmem:[%s262 + $0x7c] sm:$0xf] %v325
                $region63: #{mil_attention_forward.1} parent=50 // loop_footer
                  %s260 = sadd.s32 1, %s256
                $region64: #{mil_attention_forward.1} parent=50 // loop_footer_branch
                  %255 = sbr.rel target = $region60
                $region65: #{mil_attention_forward.1} parent=50 // loop_exit
                  _
              $region51: #{mil_attention_forward.1} parent=35 // pred_fallthru
                _
            $region36: #{mil_attention_forward.1} parent=31 // pred_fallthru
              _
            // Predicated region
            $region37: #{mil_attention_forward.1} parent=31 // pred_check
              _
            $region38: #{mil_attention_forward.1} parent=31 // pred_check_branch
              %170 = sbr.rel (0) target = $region40
            $region39: #{mil_attention_forward.1} parent=31 // pred_region
              loop: start=0, step=1, limit=1
              $region41: #{mil_attention_forward.1} parent=39 // loop_pre_header
                _
              $region42: #{mil_attention_forward.1} parent=39 // loop_header
                %s173 = sphi 0, %s177
                %p174 = scmp.ge.s32.totalorder %s173, 1
                %s178 = sphi %s164, %s164
                %s179 = sphi %s161, %s161
              $region43: #{mil_attention_forward.1} parent=39 // loop_header_branch
                %176 = sbr.rel (%p174) target = $region47
              $region44: #{mil_attention_forward.1} parent=39 // loop_body
                %v180 = vld [vmem:[%s178] sm:$0xf]
                %181 = vst [vmem:[%s179] sm:$0xf] %v180
                %v182 = vld [vmem:[%s178 + $0x4] sm:$0xf]
                %183 = vst [vmem:[%s179 + $0x4] sm:$0xf] %v182
                %v184 = vld [vmem:[%s178 + $0x8] sm:$0xf]
                %185 = vst [vmem:[%s179 + $0x8] sm:$0xf] %v184
                %v186 = vld [vmem:[%s178 + $0xc] sm:$0xf]
                %187 = vst [vmem:[%s179 + $0xc] sm:$0xf] %v186
                %v188 = vld [vmem:[%s178 + $0x10] sm:$0xf]
                %189 = vst [vmem:[%s179 + $0x10] sm:$0xf] %v188
                %v190 = vld [vmem:[%s178 + $0x14] sm:$0xf]
                %191 = vst [vmem:[%s179 + $0x14] sm:$0xf] %v190
                %v192 = vld [vmem:[%s178 + $0x18] sm:$0xf]
                %193 = vst [vmem:[%s179 + $0x18] sm:$0xf] %v192
                %v194 = vld [vmem:[%s178 + $0x1c] sm:$0xf]
                %195 = vst [vmem:[%s179 + $0x1c] sm:$0xf] %v194
                %v196 = vld [vmem:[%s178 + $0x20] sm:$0xf]
                %197 = vst [vmem:[%s179 + $0x20] sm:$0xf] %v196
                %v198 = vld [vmem:[%s178 + $0x24] sm:$0xf]
                %199 = vst [vmem:[%s179 + $0x24] sm:$0xf] %v198
                %v200 = vld [vmem:[%s178 + $0x28] sm:$0xf]
                %201 = vst [vmem:[%s179 + $0x28] sm:$0xf] %v200
                %v202 = vld [vmem:[%s178 + $0x2c] sm:$0xf]
                %203 = vst [vmem:[%s179 + $0x2c] sm:$0xf] %v202
                %v204 = vld [vmem:[%s178 + $0x30] sm:$0xf]
                %205 = vst [vmem:[%s179 + $0x30] sm:$0xf] %v204
                %v206 = vld [vmem:[%s178 + $0x34] sm:$0xf]
                %207 = vst [vmem:[%s179 + $0x34] sm:$0xf] %v206
                %v208 = vld [vmem:[%s178 + $0x38] sm:$0xf]
                %209 = vst [vmem:[%s179 + $0x38] sm:$0xf] %v208
                %v210 = vld [vmem:[%s178 + $0x3c] sm:$0xf]
                %211 = vst [vmem:[%s179 + $0x3c] sm:$0xf] %v210
                %v212 = vld [vmem:[%s178 + $0x80] sm:$0xf]
                %213 = vst [vmem:[%s179 + $0x40] sm:$0xf] %v212
                %v214 = vld [vmem:[%s178 + $0x84] sm:$0xf]
                %215 = vst [vmem:[%s179 + $0x44] sm:$0xf] %v214
                %v216 = vld [vmem:[%s178 + $0x88] sm:$0xf]
                %217 = vst [vmem:[%s179 + $0x48] sm:$0xf] %v216
                %v218 = vld [vmem:[%s178 + $0x8c] sm:$0xf]
                %219 = vst [vmem:[%s179 + $0x4c] sm:$0xf] %v218
                %v220 = vld [vmem:[%s178 + $0x90] sm:$0xf]
                %221 = vst [vmem:[%s179 + $0x50] sm:$0xf] %v220
                %v222 = vld [vmem:[%s178 + $0x94] sm:$0xf]
                %223 = vst [vmem:[%s179 + $0x54] sm:$0xf] %v222
                %v224 = vld [vmem:[%s178 + $0x98] sm:$0xf]
                %225 = vst [vmem:[%s179 + $0x58] sm:$0xf] %v224
                %v226 = vld [vmem:[%s178 + $0x9c] sm:$0xf]
                %227 = vst [vmem:[%s179 + $0x5c] sm:$0xf] %v226
                %v228 = vld [vmem:[%s178 + $0xa0] sm:$0xf]
                %229 = vst [vmem:[%s179 + $0x60] sm:$0xf] %v228
                %v230 = vld [vmem:[%s178 + $0xa4] sm:$0xf]
                %231 = vst [vmem:[%s179 + $0x64] sm:$0xf] %v230
                %v232 = vld [vmem:[%s178 + $0xa8] sm:$0xf]
                %233 = vst [vmem:[%s179 + $0x68] sm:$0xf] %v232
                %v234 = vld [vmem:[%s178 + $0xac] sm:$0xf]
                %235 = vst [vmem:[%s179 + $0x6c] sm:$0xf] %v234
                %v236 = vld [vmem:[%s178 + $0xb0] sm:$0xf]
                %237 = vst [vmem:[%s179 + $0x70] sm:$0xf] %v236
                %v238 = vld [vmem:[%s178 + $0xb4] sm:$0xf]
                %239 = vst [vmem:[%s179 + $0x74] sm:$0xf] %v238
                %v240 = vld [vmem:[%s178 + $0xb8] sm:$0xf]
                %241 = vst [vmem:[%s179 + $0x78] sm:$0xf] %v240
                %v242 = vld [vmem:[%s178 + $0xbc] sm:$0xf]
                %243 = vst [vmem:[%s179 + $0x7c] sm:$0xf] %v242
              $region45: #{mil_attention_forward.1} parent=39 // loop_footer
                %s177 = sadd.s32 1, %s173
              $region46: #{mil_attention_forward.1} parent=39 // loop_footer_branch
                %172 = sbr.rel target = $region42
              $region47: #{mil_attention_forward.1} parent=39 // loop_exit
                _
            $region40: #{mil_attention_forward.1} parent=31 // pred_fallthru
              _
          $region32: #{mil_attention_forward.1} parent=27 // pred_fallthru
            _
          %327 = vnop
        $region28: #{mil_attention_forward.1} parent=23 // pred_fallthru
          _
      $region24: #{mil_attention_forward.1} parent=5 // pred_fallthru
        _
      %p328 = scmp.le.s32.totalorder 1, %s15
      %p329 = scmp.lt.s32.totalorder %s15, 3
      %p330 = pnand %p328, %p329
      %p331 = pneg %p330
      // Predicated region
      $region66: #{mil_attention_forward.1} parent=5 // pred_check
        _
      $region67: #{mil_attention_forward.1} parent=5 // pred_check_branch
        %333 = sbr.rel (%p330) target = $region69
      $region68: #{mil_attention_forward.1} parent=5 // pred_region
        %s334 = ssub.s32 %s15, 1
        %s335 = sand.u32 %s28, 1
        %s336 = sand.u32 %s28, 1
        %s337 = smul.addr %s336, 128
        %s338 = scalar_lea.vmem [#allocation3], %s337
        // Predicated region
        $region70: #{mil_attention_forward.1} parent=68 // pred_check
          %p339 = pneg %p41
        $region71: #{mil_attention_forward.1} parent=68 // pred_check_branch
          %341 = sbr.rel (%p339) target = $region73
        $region72: #{mil_attention_forward.1} parent=68 // pred_region
          _
        $region73: #{mil_attention_forward.1} parent=68 // pred_fallthru
          _
        %s342 = sand.u32 %s28, 1
        %s343 = sand.u32 %s28, 1
        %s344 = smul.addr %s343, 128
        %s345 = scalar_lea.vmem [#allocation3], %s344
        %p346 = pneg %p41
        %p347 = pneg %p38
        %p348 = pneg %p62
        %p349 = pneg %p59
        %p350 = pneg %p83
        %p351 = pneg %p80
        %p352 = pneg %p104
        %p353 = pneg %p101
        %p354 = pneg %p130
        %p355 = pneg %p127
        %s356 = sand.u32 %s117, 1
        %s357 = scalar_lea.sflag [#allocation7], %s356
        %s358 = sand.u32 %s117, 1
        %s359 = smul.addr %s358, 4
        %s360 = scalar_lea.vmem [#allocation6], %s359
        %s361 = smul.u32 16, %s20
        %p363 = scmp.eq.s32.totalorder %s20, 0
        // Predicated region
        $region74: #{mil_attention_forward.1} parent=68 // pred_check
          %p364 = pneg %p363
        $region75: #{mil_attention_forward.1} parent=68 // pred_check_branch
          %366 = sbr.rel (%p364) target = $region77
        $region76: #{mil_attention_forward.1} parent=68 // pred_region
          %vm367 = vcmask 254976
          %368 = vst.msk [vmem:[#allocation2] sm:$0x3] %vm367, 0.0
          %369 = vst.msk [vmem:[#allocation2 + $0x2] sm:$0x3] %vm367, 0.0
        $region77: #{mil_attention_forward.1} parent=68 // pred_fallthru
          _
        %v370 = vld [vmem:[%s338] sm:$0xf]
        %v371 = vld [vmem:[%s338 + $0x4] sm:$0xf]
        %v372 = vld [vmem:[%s338 + $0x8] sm:$0xf]
        %v373 = vld [vmem:[%s338 + $0xc] sm:$0xf]
        %v374 = vld [vmem:[%s338 + $0x10] sm:$0xf]
        %v375 = vld [vmem:[%s338 + $0x14] sm:$0xf]
        %v376 = vld [vmem:[%s338 + $0x18] sm:$0xf]
        %v377 = vld [vmem:[%s338 + $0x1c] sm:$0xf]
        %v378 = vld [vmem:[%s338 + $0x20] sm:$0xf]
        %v379 = vld [vmem:[%s338 + $0x24] sm:$0xf]
        %v380 = vld [vmem:[%s338 + $0x28] sm:$0xf]
        %v381 = vld [vmem:[%s338 + $0x2c] sm:$0xf]
        %v382 = vld [vmem:[%s338 + $0x30] sm:$0xf]
        %v383 = vld [vmem:[%s338 + $0x34] sm:$0xf]
        %v384 = vld [vmem:[%s338 + $0x38] sm:$0xf]
        %v385 = vld [vmem:[%s338 + $0x3c] sm:$0xf]
        %v386 = vld [vmem:[%s338 + $0x40] sm:$0xf]
        %v387 = vld [vmem:[%s338 + $0x44] sm:$0xf]
        %v388 = vld [vmem:[%s338 + $0x48] sm:$0xf]
        %v389 = vld [vmem:[%s338 + $0x4c] sm:$0xf]
        %v390 = vld [vmem:[%s338 + $0x50] sm:$0xf]
        %v391 = vld [vmem:[%s338 + $0x54] sm:$0xf]
        %v392 = vld [vmem:[%s338 + $0x58] sm:$0xf]
        %v393 = vld [vmem:[%s338 + $0x5c] sm:$0xf]
        %v394 = vld [vmem:[%s338 + $0x60] sm:$0xf]
        %v395 = vld [vmem:[%s338 + $0x64] sm:$0xf]
        %v396 = vld [vmem:[%s338 + $0x68] sm:$0xf]
        %v397 = vld [vmem:[%s338 + $0x6c] sm:$0xf]
        %v398 = vld [vmem:[%s338 + $0x70] sm:$0xf]
        %v399 = vld [vmem:[%s338 + $0x74] sm:$0xf]
        %v400 = vld [vmem:[%s338 + $0x78] sm:$0xf]
        %v401 = vld [vmem:[%s338 + $0x7c] sm:$0xf]
        %v402 = vld [vmem:[%s1] sm:$0x1f]
        %v403 = vpack.c.bf16 %v402, %v402
        %v404 = vunpack.c.l.bf16 %v403
        %v405 = vsub.f32 %v402, %v404
        %v406 = vpack.c.bf16 %v405, %v405
        %v439 = vunpack.c.l.b16 %v370
        %v440 = vunpack.c.l.b16 %v371
        %v441 = vunpack.c.l.b16 %v372
        %v442 = vunpack.c.l.b16 %v373
        %v443 = vunpack.c.l.b16 %v374
        %v444 = vunpack.c.l.b16 %v375
        %v445 = vunpack.c.l.b16 %v376
        %v446 = vunpack.c.l.b16 %v377
        %v447 = vunpack.c.l.b16 %v378
        %v448 = vunpack.c.l.b16 %v379
        %v449 = vunpack.c.l.b16 %v380
        %v450 = vunpack.c.l.b16 %v381
        %v451 = vunpack.c.l.b16 %v382
        %v452 = vunpack.c.l.b16 %v383
        %v453 = vunpack.c.l.b16 %v384
        %v454 = vunpack.c.l.b16 %v385
        %v455 = vunpack.c.l.b16 %v386
        %v456 = vunpack.c.l.b16 %v387
        %v457 = vunpack.c.l.b16 %v388
        %v458 = vunpack.c.l.b16 %v389
        %v459 = vunpack.c.l.b16 %v390
        %v460 = vunpack.c.l.b16 %v391
        %v461 = vunpack.c.l.b16 %v392
        %v462 = vunpack.c.l.b16 %v393
        %v463 = vunpack.c.l.b16 %v394
        %v464 = vunpack.c.l.b16 %v395
        %v465 = vunpack.c.l.b16 %v396
        %v466 = vunpack.c.l.b16 %v397
        %v467 = vunpack.c.l.b16 %v398
        %v468 = vunpack.c.l.b16 %v399
        %v469 = vunpack.c.l.b16 %v400
        %v470 = vunpack.c.l.b16 %v401
        %v471 = vpack.c.b16 %v440, %v439
        %v472 = vpack.c.b16 %v442, %v441
        %v473 = vpack.c.b16 %v444, %v443
        %v474 = vpack.c.b16 %v446, %v445
        %v475 = vpack.c.b16 %v448, %v447
        %v476 = vpack.c.b16 %v450, %v449
        %v477 = vpack.c.b16 %v452, %v451
        %v478 = vpack.c.b16 %v454, %v453
        %v479 = vpack.c.b16 %v456, %v455
        %v480 = vpack.c.b16 %v458, %v457
        %v481 = vpack.c.b16 %v460, %v459
        %v482 = vpack.c.b16 %v462, %v461
        %v483 = vpack.c.b16 %v464, %v463
        %v484 = vpack.c.b16 %v466, %v465
        %v485 = vpack.c.b16 %v468, %v467
        %v486 = vpack.c.b16 %v470, %v469
        %vm487 = vcmask 261120
        %v489 = vsel %vm487, %v406, 0
        %v492 = vsel %vm487, %v471, 0
        %v495 = vsel %vm487, %v472, 0
        %v498 = vsel %vm487, %v473, 0
        %v501 = vsel %vm487, %v474, 0
        %v504 = vsel %vm487, %v475, 0
        %v507 = vsel %vm487, %v476, 0
        %v510 = vsel %vm487, %v477, 0
        %v513 = vsel %vm487, %v478, 0
        %v516 = vsel %vm487, %v479, 0
        %v519 = vsel %vm487, %v480, 0
        %v522 = vsel %vm487, %v481, 0
        %v525 = vsel %vm487, %v482, 0
        %v528 = vsel %vm487, %v483, 0
        %v531 = vsel %vm487, %v484, 0
        %v534 = vsel %vm487, %v485, 0
        %v537 = vsel %vm487, %v486, 0
        %539 = vmatprep.subr.bf16.mxu0 0
        %540 = vmatpush1.bf16.xpose.msra.mxu0 %v492
        %541 = vmatprep.subr.bf16.mxu0 0
        %542 = vmatpush1.bf16.xpose.msra.mxu0 %v495
        %543 = vmatprep.subr.bf16.mxu0 0
        %544 = vmatpush1.bf16.xpose.msra.mxu0 %v498
        %545 = vmatprep.subr.bf16.mxu0 0
        %546 = vmatpush1.bf16.xpose.msra.mxu0 %v501
        %547 = vmatprep.subr.bf16.mxu0 0
        %548 = vmatpush1.bf16.xpose.msra.mxu0 %v504
        %549 = vmatprep.subr.bf16.mxu0 0
        %550 = vmatpush1.bf16.xpose.msra.mxu0 %v507
        %551 = vmatprep.subr.bf16.mxu0 0
        %552 = vmatpush1.bf16.xpose.msra.mxu0 %v510
        %553 = vmatprep.subr.bf16.mxu0 0
        %554 = vmatpush1.bf16.xpose.msra.mxu0 %v513
        %555 = vmatprep.subr.bf16.mxu0 0
        %556 = vmatpush1.bf16.xpose.msra.mxu0 %v516
        %557 = vmatprep.subr.bf16.mxu0 0
        %558 = vmatpush1.bf16.xpose.msra.mxu0 %v519
        %559 = vmatprep.subr.bf16.mxu0 0
        %560 = vmatpush1.bf16.xpose.msra.mxu0 %v522
        %561 = vmatprep.subr.bf16.mxu0 0
        %562 = vmatpush1.bf16.xpose.msra.mxu0 %v525
        %563 = vmatprep.subr.bf16.mxu0 0
        %564 = vmatpush1.bf16.xpose.msra.mxu0 %v528
        %565 = vmatprep.subr.bf16.mxu0 0
        %566 = vmatpush1.bf16.xpose.msra.mxu0 %v531
        %567 = vmatprep.subr.bf16.mxu0 0
        %568 = vmatpush1.bf16.xpose.msra.mxu0 %v534
        %569 = vmatprep.subr.bf16.mxu0 0
        %570 = vmatpush1.bf16.xpose.msra.mxu0 %v537
        %571 = vmatprep.mubr.bf16.mxu0 0
        %572 = vmatmul.mubr.bf16.gmra.mrb[0].mxu0 %v489
        %v573 = vpop.f32.mrb[0].mxu0
        %v574 = vadd.f32 0.0, %v573
        %v575 = vpop.f32.mrb[0].mxu0
        %v576 = vadd.f32 0.0, %v575
        %v577 = vpop.f32.mrb[0].mxu0
        %v578 = vpop.f32.mrb[0].mxu0
        %579 = vdwg.mxu0
        %v581 = vsel %vm487, %v403, 0
        %583 = vmatprep.subr.bf16.mxu0 0
        %584 = vmatpush1.bf16.xpose.msra.mxu0 %v492
        %585 = vmatprep.subr.bf16.mxu0 0
        %586 = vmatpush1.bf16.xpose.msra.mxu0 %v495
        %587 = vmatprep.subr.bf16.mxu0 0
        %588 = vmatpush1.bf16.xpose.msra.mxu0 %v498
        %589 = vmatprep.subr.bf16.mxu0 0
        %590 = vmatpush1.bf16.xpose.msra.mxu0 %v501
        %591 = vmatprep.subr.bf16.mxu0 0
        %592 = vmatpush1.bf16.xpose.msra.mxu0 %v504
        %593 = vmatprep.subr.bf16.mxu0 0
        %594 = vmatpush1.bf16.xpose.msra.mxu0 %v507
        %595 = vmatprep.subr.bf16.mxu0 0
        %596 = vmatpush1.bf16.xpose.msra.mxu0 %v510
        %597 = vmatprep.subr.bf16.mxu0 0
        %598 = vmatpush1.bf16.xpose.msra.mxu0 %v513
        %599 = vmatprep.subr.bf16.mxu0 0
        %600 = vmatpush1.bf16.xpose.msra.mxu0 %v516
        %601 = vmatprep.subr.bf16.mxu0 0
        %602 = vmatpush1.bf16.xpose.msra.mxu0 %v519
        %603 = vmatprep.subr.bf16.mxu0 0
        %604 = vmatpush1.bf16.xpose.msra.mxu0 %v522
        %605 = vmatprep.subr.bf16.mxu0 0
        %606 = vmatpush1.bf16.xpose.msra.mxu0 %v525
        %607 = vmatprep.subr.bf16.mxu0 0
        %608 = vmatpush1.bf16.xpose.msra.mxu0 %v528
        %609 = vmatprep.subr.bf16.mxu0 0
        %610 = vmatpush1.bf16.xpose.msra.mxu0 %v531
        %611 = vmatprep.subr.bf16.mxu0 0
        %612 = vmatpush1.bf16.xpose.msra.mxu0 %v534
        %613 = vmatprep.subr.bf16.mxu0 0
        %614 = vmatpush1.bf16.xpose.msra.mxu0 %v537
        %615 = vmatprep.mubr.bf16.mxu0 0
        %616 = vmatmul.mubr.bf16.gmra.mrb[0].mxu0 %v581
        %v617 = vpop.f32.mrb[0].mxu0
        %v618 = vadd.f32 %v574, %v617
        %v619 = vpop.f32.mrb[0].mxu0
        %v620 = vadd.f32 %v576, %v619
        %v621 = vpop.f32.mrb[0].mxu0
        %v622 = vpop.f32.mrb[0].mxu0
        %623 = vdwg.mxu0
        %vm624 = vcmask 1041408
        %v625 = vsel %vm624, %v618, -inf
        %v626 = vsel %vm624, %v620, -inf
        %v627 = vmax.f32 %v625, %v626
        %v628 = vsub.f32 %v618, %v627
        %v629 = vsub.f32 %v620, %v627
        %v630 = vmul.f32 %v628, 1.442695
        %v631 = vpow.pop %v630
        %v632 = vmul.f32 %v629, 1.442695
        %v633 = vpow.pop %v632
        %v634 = vsel %vm624, %v631, 0.0
        %v635 = vsel %vm624, %v633, 0.0
        %v636 = vadd.f32 %v634, %v635
        %v637 = vrcp.pop %v636
        %v638 = vmul.f32 1.0, %v637
        %v639 = vmul.f32 %v631, %v638
        %v640 = vmul.f32 %v633, %v638
        %641 = vst [vmem:[%s360] sm:$0x3] %v639
        %642 = vst [vmem:[%s360 + $0x2] sm:$0x3] %v640
        %v643 = vpack.c.bf16 %v639, %v639
        %v644 = vpack.c.bf16 %v640, %v640
        %v645 = vunpack.c.l.bf16 %v643
        %v646 = vunpack.c.l.bf16 %v644
        %v647 = vsub.f32 %v639, %v645
        %v648 = vsub.f32 %v640, %v646
        %v649 = vpack.c.bf16 %v647, %v647
        %v650 = vpack.c.bf16 %v648, %v648
        %v651 = vld [vmem:[#allocation2] sm:$0x3]
        %v652 = vld [vmem:[#allocation2 + $0x2] sm:$0x3]
        %661 = vmatprep.subr.bf16.mxu0 0
        %662 = vmatpush1.bf16.msra.mxu0 %v471
        %663 = vmatprep.subr.bf16.mxu0 0
        %664 = vmatpush1.bf16.msra.mxu0 %v472
        %665 = vmatprep.subr.bf16.mxu0 0
        %666 = vmatpush1.bf16.msra.mxu0 %v473
        %667 = vmatprep.subr.bf16.mxu0 0
        %668 = vmatpush1.bf16.msra.mxu0 %v474
        %669 = vmatprep.subr.bf16.mxu0 0
        %670 = vmatpush1.bf16.msra.mxu0 %v475
        %671 = vmatprep.subr.bf16.mxu0 0
        %672 = vmatpush1.bf16.msra.mxu0 %v476
        %673 = vmatprep.subr.bf16.mxu0 0
        %674 = vmatpush1.bf16.msra.mxu0 %v477
        %675 = vmatprep.subr.bf16.mxu0 0
        %676 = vmatpush1.bf16.msra.mxu0 %v478
        %677 = vmatprep.subr.bf16.mxu0 0
        %678 = vmatpush1.bf16.msra.mxu0 0
        %679 = vmatprep.subr.bf16.mxu0 0
        %680 = vmatpush1.bf16.msra.mxu0 0
        %681 = vmatprep.subr.bf16.mxu0 0
        %682 = vmatpush1.bf16.msra.mxu0 0
        %683 = vmatprep.subr.bf16.mxu0 0
        %684 = vmatpush1.bf16.msra.mxu0 0
        %685 = vmatprep.subr.bf16.mxu0 0
        %686 = vmatpush1.bf16.msra.mxu0 0
        %687 = vmatprep.subr.bf16.mxu0 0
        %688 = vmatpush1.bf16.msra.mxu0 0
        %689 = vmatprep.subr.bf16.mxu0 0
        %690 = vmatpush1.bf16.msra.mxu0 0
        %691 = vmatprep.subr.bf16.mxu0 0
        %692 = vmatpush1.bf16.msra.mxu0 0
        %693 = vmatprep.mubr.bf16.mxu0 0
        %694 = vmatmul.mubr.bf16.gmra.mrb[0].mxu0 %v649
        %v695 = vpop.f32.mrb[0].mxu0
        %v696 = vadd.f32 0.0, %v695
        %v697 = vpop.f32.mrb[0].mxu0
        %v698 = vpop.f32.mrb[0].mxu0
        %v699 = vpop.f32.mrb[0].mxu0
        %700 = vdwg.mxu0
        %709 = vmatprep.subr.bf16.mxu0 0
        %710 = vmatpush1.bf16.msra.mxu0 %v479
        %711 = vmatprep.subr.bf16.mxu0 0
        %712 = vmatpush1.bf16.msra.mxu0 %v480
        %713 = vmatprep.subr.bf16.mxu0 0
        %714 = vmatpush1.bf16.msra.mxu0 %v481
        %715 = vmatprep.subr.bf16.mxu0 0
        %716 = vmatpush1.bf16.msra.mxu0 %v482
        %717 = vmatprep.subr.bf16.mxu0 0
        %718 = vmatpush1.bf16.msra.mxu0 %v483
        %719 = vmatprep.subr.bf16.mxu0 0
        %720 = vmatpush1.bf16.msra.mxu0 %v484
        %721 = vmatprep.subr.bf16.mxu0 0
        %722 = vmatpush1.bf16.msra.mxu0 %v485
        %723 = vmatprep.subr.bf16.mxu0 0
        %724 = vmatpush1.bf16.msra.mxu0 %v486
        %725 = vmatprep.subr.bf16.mxu0 0
        %726 = vmatpush1.bf16.msra.mxu0 0
        %727 = vmatprep.subr.bf16.mxu0 0
        %728 = vmatpush1.bf16.msra.mxu0 0
        %729 = vmatprep.subr.bf16.mxu0 0
        %730 = vmatpush1.bf16.msra.mxu0 0
        %731 = vmatprep.subr.bf16.mxu0 0
        %732 = vmatpush1.bf16.msra.mxu0 0
        %733 = vmatprep.subr.bf16.mxu0 0
        %734 = vmatpush1.bf16.msra.mxu0 0
        %735 = vmatprep.subr.bf16.mxu0 0
        %736 = vmatpush1.bf16.msra.mxu0 0
        %737 = vmatprep.subr.bf16.mxu0 0
        %738 = vmatpush1.bf16.msra.mxu0 0
        %739 = vmatprep.subr.bf16.mxu0 0
        %740 = vmatpush1.bf16.msra.mxu0 0
        %741 = vmatprep.mubr.bf16.mxu0 0
        %742 = vmatmul.mubr.bf16.gmra.mrb[0].mxu0 %v650
        %v743 = vpop.f32.mrb[0].mxu0
        %v744 = vadd.f32 0.0, %v743
        %v745 = vpop.f32.mrb[0].mxu0
        %v746 = vpop.f32.mrb[0].mxu0
        %v747 = vpop.f32.mrb[0].mxu0
        %748 = vdwg.mxu0
        %749 = vmatprep.subr.bf16.mxu0 0
        %750 = vmatpush1.bf16.msra.mxu0 %v471
        %751 = vmatprep.subr.bf16.mxu0 0
        %752 = vmatpush1.bf16.msra.mxu0 %v472
        %753 = vmatprep.subr.bf16.mxu0 0
        %754 = vmatpush1.bf16.msra.mxu0 %v473
        %755 = vmatprep.subr.bf16.mxu0 0
        %756 = vmatpush1.bf16.msra.mxu0 %v474
        %757 = vmatprep.subr.bf16.mxu0 0
        %758 = vmatpush1.bf16.msra.mxu0 %v475
        %759 = vmatprep.subr.bf16.mxu0 0
        %760 = vmatpush1.bf16.msra.mxu0 %v476
        %761 = vmatprep.subr.bf16.mxu0 0
        %762 = vmatpush1.bf16.msra.mxu0 %v477
        %763 = vmatprep.subr.bf16.mxu0 0
        %764 = vmatpush1.bf16.msra.mxu0 %v478
        %765 = vmatprep.subr.bf16.mxu0 0
        %766 = vmatpush1.bf16.msra.mxu0 0
        %767 = vmatprep.subr.bf16.mxu0 0
        %768 = vmatpush1.bf16.msra.mxu0 0
        %769 = vmatprep.subr.bf16.mxu0 0
        %770 = vmatpush1.bf16.msra.mxu0 0
        %771 = vmatprep.subr.bf16.mxu0 0
        %772 = vmatpush1.bf16.msra.mxu0 0
        %773 = vmatprep.subr.bf16.mxu0 0
        %774 = vmatpush1.bf16.msra.mxu0 0
        %775 = vmatprep.subr.bf16.mxu0 0
        %776 = vmatpush1.bf16.msra.mxu0 0
        %777 = vmatprep.subr.bf16.mxu0 0
        %778 = vmatpush1.bf16.msra.mxu0 0
        %779 = vmatprep.subr.bf16.mxu0 0
        %780 = vmatpush1.bf16.msra.mxu0 0
        %781 = vmatprep.mubr.bf16.mxu0 0
        %782 = vmatmul.mubr.bf16.gmra.mrb[0].mxu0 %v643
        %v783 = vpop.f32.mrb[0].mxu0
        %v784 = vadd.f32 %v696, %v783
        %v785 = vpop.f32.mrb[0].mxu0
        %v786 = vpop.f32.mrb[0].mxu0
        %v787 = vpop.f32.mrb[0].mxu0
        %788 = vdwg.mxu0
        %789 = vmatprep.subr.bf16.mxu0 0
        %790 = vmatpush1.bf16.msra.mxu0 %v479
        %791 = vmatprep.subr.bf16.mxu0 0
        %792 = vmatpush1.bf16.msra.mxu0 %v480
        %793 = vmatprep.subr.bf16.mxu0 0
        %794 = vmatpush1.bf16.msra.mxu0 %v481
        %795 = vmatprep.subr.bf16.mxu0 0
        %796 = vmatpush1.bf16.msra.mxu0 %v482
        %797 = vmatprep.subr.bf16.mxu0 0
        %798 = vmatpush1.bf16.msra.mxu0 %v483
        %799 = vmatprep.subr.bf16.mxu0 0
        %800 = vmatpush1.bf16.msra.mxu0 %v484
        %801 = vmatprep.subr.bf16.mxu0 0
        %802 = vmatpush1.bf16.msra.mxu0 %v485
        %803 = vmatprep.subr.bf16.mxu0 0
        %804 = vmatpush1.bf16.msra.mxu0 %v486
        %805 = vmatprep.subr.bf16.mxu0 0
        %806 = vmatpush1.bf16.msra.mxu0 0
        %807 = vmatprep.subr.bf16.mxu0 0
        %808 = vmatpush1.bf16.msra.mxu0 0
        %809 = vmatprep.subr.bf16.mxu0 0
        %810 = vmatpush1.bf16.msra.mxu0 0
        %811 = vmatprep.subr.bf16.mxu0 0
        %812 = vmatpush1.bf16.msra.mxu0 0
        %813 = vmatprep.subr.bf16.mxu0 0
        %814 = vmatpush1.bf16.msra.mxu0 0
        %815 = vmatprep.subr.bf16.mxu0 0
        %816 = vmatpush1.bf16.msra.mxu0 0
        %817 = vmatprep.subr.bf16.mxu0 0
        %818 = vmatpush1.bf16.msra.mxu0 0
        %819 = vmatprep.subr.bf16.mxu0 0
        %820 = vmatpush1.bf16.msra.mxu0 0
        %821 = vmatprep.mubr.bf16.mxu0 0
        %822 = vmatmul.mubr.bf16.gmra.mrb[0].mxu0 %v644
        %v823 = vpop.f32.mrb[0].mxu0
        %v824 = vadd.f32 %v744, %v823
        %v825 = vpop.f32.mrb[0].mxu0
        %v826 = vpop.f32.mrb[0].mxu0
        %v827 = vpop.f32.mrb[0].mxu0
        %828 = vdwg.mxu0
        %v829 = vadd.f32 %v651, %v784
        %v830 = vadd.f32 %v652, %v824
        %vm831 = vcmask 254976
        %832 = vst.msk [vmem:[#allocation2] sm:$0x3] %vm831, %v829
        %833 = vst.msk [vmem:[#allocation2 + $0x2] sm:$0x3] %vm831, %v830
        %p834 = scmp.eq.s32.totalorder %s20, 1
        // Predicated region
        $region78: #{mil_attention_forward.1} parent=68 // pred_check
          %p835 = pneg %p834
        $region79: #{mil_attention_forward.1} parent=68 // pred_check_branch
          %837 = sbr.rel (%p835) target = $region81
        $region80: #{mil_attention_forward.1} parent=68 // pred_region
          %v838 = vld [vmem:[#allocation2] sm:$0x3]
          %v839 = vld [vmem:[#allocation2 + $0x2] sm:$0x3]
          %v840 = vcombine.low %v838, %v839
          %v842 = vunpack.c.l.s4 1934713408
          %v843 = vunpack.c.0.s8 %v842
          %v844 = vlaneseq
          %v845 = vshrl.u32 %v844, 7
          %v846 = vsub.s32 %v843, %v845
          %v847 = vrot.slane %v840, %v846
          %v848 = vcombine.high %v847, 0.0
          %850 = vrot.lane.b32.xlu0 %v848, 32
          %v851 = vpop.permute.xlu0 %850
          %v853 = vsel %vm487, %v847, %v851
          %v854 = vlaneseq
          %v855 = vshrl.u32 %v854, 7
          %v856 = vsub.s32 2, %v855
          %v857 = vrot.slane %v402, %v856
          %v858 = vmul.f32 %v853, %v857
          %v859 = vlaneseq
          %v860 = vshrl.u32 %v859, 7
          %v861 = vsub.s32 3, %v860
          %v862 = vrot.slane %v402, %v861
          %v863 = vadd.f32 %v858, %v862
          %v864 = vmax.f32 %v863, 0.0
          %v865 = vld [vmem:[%s2] sm:$0xff]
          %v866 = vld [vmem:[%s2 + $0x8] sm:$0xff]
          %v867 = vld [vmem:[%s2 + $0x10] sm:$0xff]
          %v868 = vld [vmem:[%s2 + $0x18] sm:$0xff]
          %v869 = vld [vmem:[%s2 + $0x20] sm:$0xff]
          %v870 = vld [vmem:[%s2 + $0x28] sm:$0xff]
          %v871 = vld [vmem:[%s2 + $0x30] sm:$0xff]
          %v872 = vld [vmem:[%s2 + $0x38] sm:$0xff]
          %v873 = vlaneseq
          %v874 = vshrl.u32 %v873, 7
          %v875 = vsub.s32 4, %v874
          %v876 = vrot.slane %v402, %v875
          %vm877 = vcmask 523264
          %v879 = vsel %vm877, %v864, 0
          %881 = vmatprep.subr.mxu0 0.0
          %882 = vmatpush1.msra.mxu0 %v865
          %883 = vmatprep.subr.mxu0 0.0
          %884 = vmatpush1.msra.mxu0 %v866
          %885 = vmatprep.subr.mxu0 0.0
          %886 = vmatpush1.msra.mxu0 %v867
          %887 = vmatprep.subr.mxu0 0.0
          %888 = vmatpush1.msra.mxu0 %v868
          %889 = vmatprep.subr.mxu0 0.0
          %890 = vmatpush1.msra.mxu0 %v869
          %891 = vmatprep.subr.mxu0 0.0
          %892 = vmatpush1.msra.mxu0 %v870
          %893 = vmatprep.subr.mxu0 0.0
          %894 = vmatpush1.msra.mxu0 %v871
          %895 = vmatprep.subr.mxu0 0.0
          %896 = vmatpush1.msra.mxu0 %v872
          %897 = vmatprep.subr.mxu0 0.0
          %898 = vmatpush1.msra.mxu0 0.0
          %899 = vmatprep.subr.mxu0 0.0
          %900 = vmatpush1.msra.mxu0 0.0
          %901 = vmatprep.subr.mxu0 0.0
          %902 = vmatpush1.msra.mxu0 0.0
          %903 = vmatprep.subr.mxu0 0.0
          %904 = vmatpush1.msra.mxu0 0.0
          %905 = vmatprep.subr.mxu0 0.0
          %906 = vmatpush1.msra.mxu0 0.0
          %907 = vmatprep.subr.mxu0 0.0
          %908 = vmatpush1.msra.mxu0 0.0
          %909 = vmatprep.subr.mxu0 0.0
          %910 = vmatpush1.msra.mxu0 0.0
          %911 = vmatprep.subr.mxu0 0.0
          %912 = vmatpush1.msra.mxu0 0.0
          %913 = vmatprep.subr.mxu0 0.0
          %914 = vmatpush1.msra.mxu0 0.0
          %915 = vmatprep.subr.mxu0 0.0
          %916 = vmatpush1.msra.mxu0 0.0
          %917 = vmatprep.subr.mxu0 0.0
          %918 = vmatpush1.msra.mxu0 0.0
          %919 = vmatprep.subr.mxu0 0.0
          %920 = vmatpush1.msra.mxu0 0.0
          %921 = vmatprep.subr.mxu0 0.0
          %922 = vmatpush1.msra.mxu0 0.0
          %923 = vmatprep.subr.mxu0 0.0
          %924 = vmatpush1.msra.mxu0 0.0
          %925 = vmatprep.subr.mxu0 0.0
          %926 = vmatpush1.msra.mxu0 0.0
          %927 = vmatprep.subr.mxu0 0.0
          %928 = vmatpush1.msra.mxu0 0.0
          %929 = vmatprep.subr.mxu0 0.0
          %930 = vmatpush1.msra.mxu0 0.0
          %931 = vmatprep.subr.mxu0 0.0
          %932 = vmatpush1.msra.mxu0 0.0
          %933 = vmatprep.subr.mxu0 0.0
          %934 = vmatpush1.msra.mxu0 0.0
          %935 = vmatprep.subr.mxu0 0.0
          %936 = vmatpush1.msra.mxu0 0.0
          %937 = vmatprep.subr.mxu0 0.0
          %938 = vmatpush1.msra.mxu0 0.0
          %939 = vmatprep.subr.mxu0 0.0
          %940 = vmatpush1.msra.mxu0 0.0
          %941 = vmatprep.subr.mxu0 0.0
          %942 = vmatpush1.msra.mxu0 0.0
          %943 = vmatprep.subr.mxu0 0.0
          %944 = vmatpush1.msra.mxu0 0.0
          %945 = vmatprep.mubr.f32.mxu0 0.0
          %946 = vmatmul.mubr.f32.gmra.mrb[0].mxu0 %v879
          %v947 = vpop.f32.mrb[0].mxu0
          %v948 = vadd.f32 %v876, %v947
          %v949 = vpop.f32.mrb[0].mxu0
          %950 = vdwg.mxu0
          %vm951 = vcmask 25600
          %952 = vst.msk [vmem:[#allocation4] sm:$0x3] %vm951, %v948
        $region81: #{mil_attention_forward.1} parent=68 // pred_fallthru
          _
        %s953 = sand.u32 %s117, 1
        %s954 = scalar_lea.sflag [#allocation7], %s953
        %s955 = sand.u32 %s117, 1
        %s956 = smul.addr %s955, 4
        %s957 = scalar_lea.vmem [#allocation6], %s956
        // Predicated region
        $region82: #{mil_attention_forward.1} parent=68 // pred_check
          %p958 = pneg %p101
        $region83: #{mil_attention_forward.1} parent=68 // pred_check_branch
          %960 = sbr.rel (%p958) target = $region85
        $region84: #{mil_attention_forward.1} parent=68 // pred_region
          %s962 = ssub.s32 32, 32
          %963 = vsyncadd [#allocation5], %s962
          %s965 = sshll.u32 [#allocation4], 4
          %s966 = int_to_ptr.vmem [resolvable:$true] %s965
          %968 = dma.vmem_to_hbm [thread:$0]  %s966, 32, %s3, [#allocation5]
        $region85: #{mil_attention_forward.1} parent=68 // pred_fallthru
          _
        // Predicated region
        $region86: #{mil_attention_forward.1} parent=68 // pred_check
          %p969 = pneg %p127
        $region87: #{mil_attention_forward.1} parent=68 // pred_check_branch
          %971 = sbr.rel (%p969) target = $region89
        $region88: #{mil_attention_forward.1} parent=68 // pred_region
          %s973 = ssub.s32 64, 64
          %974 = vsyncadd %s954, %s973
          %s975 = smul.addr %s20, 32
          %s976 = scalar_lea.hbm %s4, %s975
          %s977 = sshll.u32 %s957, 4
          %s978 = int_to_ptr.vmem [resolvable:$true] %s977
          %983 = dma.vmem_to_hbm [thread:$0]  %s978, 64, %s976, %s954, 32, 64, 2
        $region89: #{mil_attention_forward.1} parent=68 // pred_fallthru
          _
        // Predicated region
        $region90: #{mil_attention_forward.1} parent=68 // pred_check
          %p984 = pneg %p101
        $region91: #{mil_attention_forward.1} parent=68 // pred_check_branch
          %986 = sbr.rel (%p984) target = $region93
        $region92: #{mil_attention_forward.1} parent=68 // pred_region
          %987 = dma.done [#allocation5], 32
        $region93: #{mil_attention_forward.1} parent=68 // pred_fallthru
          _
      $region69: #{mil_attention_forward.1} parent=5 // pred_fallthru
        _
      %p988 = scmp.le.s32.totalorder 2, %s15
      // Predicated region
      $region94: #{mil_attention_forward.1} parent=5 // pred_check
        %p989 = pneg %p988
      $region95: #{mil_attention_forward.1} parent=5 // pred_check_branch
        %991 = sbr.rel (%p989) target = $region97
      $region96: #{mil_attention_forward.1} parent=5 // pred_region
        %s992 = ssub.s32 %s15, 2
        // Predicated region
        $region98: #{mil_attention_forward.1} parent=96 // pred_check
          %p993 = pneg %p133
        $region99: #{mil_attention_forward.1} parent=96 // pred_check_branch
          %995 = sbr.rel (%p993) target = $region101
        $region100: #{mil_attention_forward.1} parent=96 // pred_region
          %s996 = sand.u32 %s118, 1
          %s997 = scalar_lea.sflag [#allocation7], %s996
          %s998 = sand.u32 %s118, 1
          %s999 = smul.addr %s998, 4
          %s1000 = scalar_lea.vmem [#allocation6], %s999
          %1001 = dma.done %s997, 64
        $region101: #{mil_attention_forward.1} parent=96 // pred_fallthru
          _
      $region97: #{mil_attention_forward.1} parent=5 // pred_fallthru
        _
    $region6: #{mil_attention_forward.1} parent=1 // loop_footer
      %s19 = sadd.s32 1, %s15
    $region7: #{mil_attention_forward.1} parent=1 // loop_footer_branch
      %14 = sbr.rel target = $region3
    $region8: #{mil_attention_forward.1} parent=1 // loop_exit
      _
    %1002 = vsyncpa [#allocation5], 1
    %s1003 = scalar_lea.sflag [#allocation5], 1
    %1004 = vsyncpa %s1003, 1
    %1005 = vsyncpa [#allocation7], 1
    %s1006 = scalar_lea.sflag [#allocation7], 1
    %1007 = vsyncpa %s1006, 1

</llo_original>
